<compile_context>
chip_gen: v5e
topology: v5e:2x2
jax: 0.10.0
libtpu: 0.0.40
codegen_flags: <defaults>
</compile_context>

<pallas_src>
import functools

import jax
import jax.numpy as jnp
from jax.experimental import pallas as pl
from jax.experimental.pallas import tpu as pltpu

LANE = 128


def channel_attention_kernel(x_ref, w1_ref, w2_ref, o_ref,
                             sum_acc, max_acc, pooled, *, hw_total):
    # x_ref : (B_tile, C, HW_tile)  w1_ref : (C, Cr)  w2_ref : (Cr, C)
    # o_ref : (B_tile, C)
    # sum_acc / max_acc : (B_tile, C, chunk) f32   pooled : (2*B_tile, C) f32
    hw_idx = pl.program_id(1)
    b_tile, c, hw_tile = x_ref.shape
    chunk = sum_acc.shape[-1]                 # lane width of partial accumulators
    n_chunks = hw_tile // chunk

    @pl.when(hw_idx == 0)
    def _init():
        sum_acc[...] = jnp.zeros(sum_acc.shape, sum_acc.dtype)
        max_acc[...] = jnp.full(max_acc.shape, -jnp.inf, max_acc.dtype)

    # Valid spatial positions remaining in this HW tile (the partial last block
    # contains unspecified padding which must be masked out).
    rem = hw_total - hw_idx * hw_tile
    lane_ids = jax.lax.broadcasted_iota(jnp.int32, (b_tile, c, chunk), 2)

    s = sum_acc[...]
    m = max_acc[...]
    for j in range(n_chunks):                 # static, unrolled; 128-lane aligned
        xj = x_ref[:, :, j * chunk:(j + 1) * chunk].astype(jnp.float32)
        valid = lane_ids < (rem - j * chunk)
        s = s + jnp.where(valid, xj, 0.0)
        m = jnp.maximum(m, jnp.where(valid, xj, -jnp.inf))
    sum_acc[...] = s
    max_acc[...] = m

    @pl.when(hw_idx == pl.num_programs(1) - 1)
    def _finalize():
        avg = jnp.sum(sum_acc[...], axis=-1) * (1.0 / hw_total)   # (B_tile, C)
        mx = jnp.max(max_acc[...], axis=-1)                       # (B_tile, C)
        # Fused fc: one pass over the weights for both pooled operands.
        pooled[0:b_tile, :] = avg
        pooled[b_tile:2 * b_tile, :] = mx
        v = pooled[...]                                           # (2*B_tile, C)
        h = jnp.maximum(
            jnp.dot(v, w1_ref[...], preferred_element_type=jnp.float32), 0.0)
        y = jnp.dot(h, w2_ref[...], preferred_element_type=jnp.float32)
        out = jax.nn.sigmoid(y[0:b_tile, :] + y[b_tile:2 * b_tile, :])
        o_ref[...] = out.astype(o_ref.dtype)


def channel_attention(x, w1, w2, *, hw_tile=None, b_tile=None,
                      vmem_limit_bytes=48 * 1024 * 1024):
    """x: (B, C, H, W) NCHW. w1: (Cr, C) conv1 weight (squeezed). w2: (C, Cr)."""
    B, C, H, W = x.shape
    HW = H * W
    x_flat = x.reshape(B, C, HW)                     # free metadata reshape
    w1_t = jnp.transpose(w1).astype(jnp.float32)     # (C, Cr)
    w2_t = jnp.transpose(w2).astype(jnp.float32)     # (Cr, C)
    Cr = w1_t.shape[1]

    # Batch tiling: multiple of 8 sublanes (or the full B) so the (b_tile, C)
    # output block obeys the (8, 128) rule. >=2 tiles lets v7x use both cores.
    if b_tile is None:
        b_tile = 8 if (B % 8 == 0) else B
    assert B % b_tile == 0

    # HW tiling: lane-dense multiple of 128, sized so one buffer is ~6 MiB
    # (2x double-buffered + scratch fits the scoped-VMEM limit on v5e/v6e/v7x).
    if hw_tile is None:
        itemsize = jnp.dtype(x.dtype).itemsize
        target_block_bytes = 6 * 1024 * 1024
        max_hw = max(LANE,
                     (target_block_bytes // (b_tile * C * itemsize)) // LANE * LANE)
        hw_tile = min(max_hw, (HW // LANE) * LANE) if HW >= LANE else HW
    assert hw_tile == HW or hw_tile % LANE == 0

    chunk = min(LANE, hw_tile)
    n_b = B // b_tile
    n_hw = pl.cdiv(HW, hw_tile)

    kernel = functools.partial(channel_attention_kernel, hw_total=HW)

    out = pl.pallas_call(
        kernel,
        out_shape=jax.ShapeDtypeStruct((B, C), x.dtype),
        grid_spec=pltpu.PrefetchScalarGridSpec(
            num_scalar_prefetch=0,
            grid=(n_b, n_hw),
            in_specs=[
                pl.BlockSpec((b_tile, C, hw_tile), lambda b, h: (b, 0, h)),
                pl.BlockSpec((C, Cr), lambda b, h: (0, 0)),   # resident weights
                pl.BlockSpec((Cr, C), lambda b, h: (0, 0)),
            ],
            out_specs=pl.BlockSpec((b_tile, C), lambda b, h: (b, 0)),
            scratch_shapes=[
                pltpu.VMEM((b_tile, C, chunk), jnp.float32),   # partial sum
                pltpu.VMEM((b_tile, C, chunk), jnp.float32),   # partial max
                pltpu.VMEM((2 * b_tile, C), jnp.float32),      # fused fc operand
            ],
        ),
        compiler_params=pltpu.CompilerParams(
            dimension_semantics=("parallel", "arbitrary"),
            vmem_limit_bytes=vmem_limit_bytes,
        ),
    )(x_flat, w1_t, w2_t)

    return out.reshape(B, C, 1, 1)


def reference(x, w1, w2):
    # Pure-JAX reference matching the PyTorch module.
    avg = jnp.mean(x, axis=(2, 3))                   # (B, C)
    mx = jnp.max(x, axis=(2, 3))                     # (B, C)

    def fc(v):
        h = jnp.maximum(v @ w1.T, 0.0)               # (B, Cr)
        return h @ w2.T                              # (B, C)

    out = jax.nn.sigmoid(fc(avg) + fc(mx))
    return out[:, :, None, None]


if __name__ == "__main__":
    B, C, H, W = 2, 32, 16, 16
    reduction = 16
    Cr = C // reduction

    key = jax.random.PRNGKey(0)
    kx, k1, k2 = jax.random.split(key, 3)

    x = jax.random.normal(kx, (B, C, H, W), dtype=jnp.float32)
    # Conv2d weights (out, in, 1, 1) squeezed to (out, in); deterministic init.
    w1 = jax.random.normal(k1, (Cr, C), dtype=jnp.float32) * 0.1
    w2 = jax.random.normal(k2, (C, Cr), dtype=jnp.float32) * 0.1

    out = jax.block_until_ready(channel_attention(x, w1, w2))
    ref = reference(x, w1, w2)
    assert out.shape == (B, C, 1, 1)
    assert jnp.allclose(out, ref, atol=1e-5, rtol=1e-5), "mismatch vs reference"

    # Exercise the multi-step HW reduction pipeline + ragged-tail masking path
    # (HW = 225 is not a multiple of 128 -> partial last block, masked mean/max).
    x2 = jax.random.normal(kx, (B, C, 15, 15), dtype=jnp.float32)
    out2 = jax.block_until_ready(channel_attention(x2, w1, w2, hw_tile=128))
    ref2 = reference(x2, w1, w2)
    assert jnp.allclose(out2, ref2, atol=1e-5, rtol=1e-5), "mismatch (ragged HW)"

    print("KERNEL_OK")
</pallas_src>

<mosaic_0001>
module attributes {stable_mosaic.version = 11 : i64} {
  func.func @channel_attention_kernel(%arg0: i32, %arg1: i32, %arg2: memref<2x32x256xf32, #tpu.memory_space<vmem>>, %arg3: memref<32x2xf32, #tpu.memory_space<vmem>>, %arg4: memref<2x32xf32, #tpu.memory_space<vmem>>, %arg5: memref<2x32xf32, #tpu.memory_space<vmem>>, %arg6: memref<2x32x128xf32, #tpu.memory_space<vmem>>, %arg7: memref<2x32x128xf32, #tpu.memory_space<vmem>>, %arg8: memref<4x32xf32, #tpu.memory_space<vmem>>) attributes {dimension_semantics = [#tpu.dimension_semantics<parallel>, #tpu.dimension_semantics<arbitrary>], iteration_bounds = array<i64: 1, 1>, scalar_prefetch = 0 : i64, scratch_operands = 3 : i64, tpu.core_type = #tpu.core_type<tc>, window_params = [{transform_indices = @transform_0, window_bounds = array<i64: 2, 32, 256>}, {pipeline_mode = #tpu.pipeline_mode<synchronous>, transform_indices = @transform_1, window_bounds = array<i64: 32, 2>}, {pipeline_mode = #tpu.pipeline_mode<synchronous>, transform_indices = @transform_2, window_bounds = array<i64: 2, 32>}, {transform_indices = @transform_3, window_bounds = array<i64: 2, 32>}]} {
    %c0_i32 = arith.constant 0 : i32
    %0 = arith.cmpi eq, %arg1, %c0_i32 : i32
    %1 = arith.extui %0 : i1 to i32
    %c0_i32_0 = arith.constant 0 : i32
    %2 = arith.cmpi ne, %1, %c0_i32_0 : i32
    scf.if %2 {
      %cst_24 = arith.constant 0.000000e+00 : f32
      %33 = vector.broadcast %cst_24 : f32 to vector<2x32x128xf32>
      %c0_25 = arith.constant 0 : index
      %c0_26 = arith.constant 0 : index
      %c0_27 = arith.constant 0 : index
      %34 = vector.load %arg6[%c0_25, %c0_26, %c0_27] : memref<2x32x128xf32, #tpu.memory_space<vmem>>, vector<2x32x128xf32>
      tpu.vector_store %arg6[%c0_25, %c0_26, %c0_27], %33 {strides = array<i32>} : memref<2x32x128xf32, #tpu.memory_space<vmem>>, vector<2x32x128xf32>,
      %cst_28 = arith.constant 0xFF800000 : f32
      %35 = vector.broadcast %cst_28 : f32 to vector<2x32x128xf32>
      %c0_29 = arith.constant 0 : index
      %c0_30 = arith.constant 0 : index
      %c0_31 = arith.constant 0 : index
      %36 = vector.load %arg7[%c0_29, %c0_30, %c0_31] : memref<2x32x128xf32, #tpu.memory_space<vmem>>, vector<2x32x128xf32>
      tpu.vector_store %arg7[%c0_29, %c0_30, %c0_31], %35 {strides = array<i32>} : memref<2x32x128xf32, #tpu.memory_space<vmem>>, vector<2x32x128xf32>,
    } else {
    }
    %c256_i32 = arith.constant 256 : i32
    %3 = arith.muli %arg1, %c256_i32 : i32
    %c256_i32_1 = arith.constant 256 : i32
    %4 = arith.subi %c256_i32_1, %3 : i32
    %5 = tpu.iota {dimensions = array<i32: 2>} : vector<2x32x128xi32>
    %c0 = arith.constant 0 : index
    %c0_2 = arith.constant 0 : index
    %c0_3 = arith.constant 0 : index
    %6 = vector.load %arg6[%c0, %c0_2, %c0_3] : memref<2x32x128xf32, #tpu.memory_space<vmem>>, vector<2x32x128xf32>
    %c0_4 = arith.constant 0 : index
    %c0_5 = arith.constant 0 : index
    %c0_6 = arith.constant 0 : index
    %7 = vector.load %arg7[%c0_4, %c0_5, %c0_6] : memref<2x32x128xf32, #tpu.memory_space<vmem>>, vector<2x32x128xf32>
    %c0_7 = arith.constant 0 : index
    %c0_8 = arith.constant 0 : index
    %c0_9 = arith.constant 0 : index
    %8 = vector.load %arg2[%c0_7, %c0_8, %c0_9] : memref<2x32x256xf32, #tpu.memory_space<vmem>>, vector<2x32x128xf32>
    %c0_i32_10 = arith.constant 0 : i32
    %9 = arith.subi %4, %c0_i32_10 : i32
    %10 = vector.broadcast %9 : i32 to vector<2x32x128xi32>
    %11 = arith.cmpi slt, %5, %10 : vector<2x32x128xi32>
    %cst = arith.constant 0.000000e+00 : f32
    %12 = vector.broadcast %cst : f32 to vector<2x32x128xf32>
    %13 = arith.select %11, %8, %12 : vector<2x32x128xi1>, vector<2x32x128xf32>
    %14 = arith.addf %6, %13 : vector<2x32x128xf32>
    %cst_11 = arith.constant 0xFF800000 : f32
    %15 = vector.broadcast %cst_11 : f32 to vector<2x32x128xf32>
    %16 = arith.select %11, %8, %15 : vector<2x32x128xi1>, vector<2x32x128xf32>
    %17 = arith.maximumf %7, %16 : vector<2x32x128xf32>
    %c0_12 = arith.constant 0 : index
    %c0_13 = arith.constant 0 : index
    %c128 = arith.constant 128 : index
    %18 = vector.load %arg2[%c0_12, %c0_13, %c128] : memref<2x32x256xf32, #tpu.memory_space<vmem>>, vector<2x32x128xf32>
    %c128_i32 = arith.constant 128 : i32
    %19 = arith.subi %4, %c128_i32 : i32
    %20 = vector.broadcast %19 : i32 to vector<2x32x128xi32>
    %21 = arith.cmpi slt, %5, %20 : vector<2x32x128xi32>
    %cst_14 = arith.constant 0.000000e+00 : f32
    %22 = vector.broadcast %cst_14 : f32 to vector<2x32x128xf32>
    %23 = arith.select %21, %18, %22 : vector<2x32x128xi1>, vector<2x32x128xf32>
    %24 = arith.addf %14, %23 : vector<2x32x128xf32>
    %cst_15 = arith.constant 0xFF800000 : f32
    %25 = vector.broadcast %cst_15 : f32 to vector<2x32x128xf32>
    %26 = arith.select %21, %18, %25 : vector<2x32x128xi1>, vector<2x32x128xf32>
    %27 = arith.maximumf %17, %26 : vector<2x32x128xf32>
    %c0_16 = arith.constant 0 : index
    %c0_17 = arith.constant 0 : index
    %c0_18 = arith.constant 0 : index
    %28 = vector.load %arg6[%c0_16, %c0_17, %c0_18] : memref<2x32x128xf32, #tpu.memory_space<vmem>>, vector<2x32x128xf32>
    tpu.vector_store %arg6[%c0_16, %c0_17, %c0_18], %24 {strides = array<i32>} : memref<2x32x128xf32, #tpu.memory_space<vmem>>, vector<2x32x128xf32>,
    %c0_19 = arith.constant 0 : index
    %c0_20 = arith.constant 0 : index
    %c0_21 = arith.constant 0 : index
    %29 = vector.load %arg7[%c0_19, %c0_20, %c0_21] : memref<2x32x128xf32, #tpu.memory_space<vmem>>, vector<2x32x128xf32>
    tpu.vector_store %arg7[%c0_19, %c0_20, %c0_21], %27 {strides = array<i32>} : memref<2x32x128xf32, #tpu.memory_space<vmem>>, vector<2x32x128xf32>,
    %c0_i32_22 = arith.constant 0 : i32
    %30 = arith.cmpi eq, %arg1, %c0_i32_22 : i32
    %31 = arith.extui %30 : i1 to i32
    %c0_i32_23 = arith.constant 0 : i32
    %32 = arith.cmpi ne, %31, %c0_i32_23 : i32
    scf.if %32 {
      %c0_24 = arith.constant 0 : index
      %c0_25 = arith.constant 0 : index
      %c0_26 = arith.constant 0 : index
      %33 = vector.load %arg6[%c0_24, %c0_25, %c0_26] : memref<2x32x128xf32, #tpu.memory_space<vmem>>, vector<2x32x128xf32>
      %cst_27 = arith.constant dense<0.000000e+00> : vector<2x32xf32>
      %34 = vector.multi_reduction <add>, %33, %cst_27 [2] : vector<2x32x128xf32> to vector<2x32xf32>
      %cst_28 = arith.constant 3.906250e-03 : f32
      %35 = vector.broadcast %cst_28 : f32 to vector<2x32xf32>
      %36 = arith.mulf %34, %35 : vector<2x32xf32>
      %c0_29 = arith.constant 0 : index
      %c0_30 = arith.constant 0 : index
      %c0_31 = arith.constant 0 : index
      %37 = vector.load %arg7[%c0_29, %c0_30, %c0_31] : memref<2x32x128xf32, #tpu.memory_space<vmem>>, vector<2x32x128xf32>
      %cst_32 = arith.constant dense<0xFF800000> : vector<2x32xf32>
      %38 = vector.multi_reduction <maximumf>, %37, %cst_32 [2] : vector<2x32x128xf32> to vector<2x32xf32>
      %c0_33 = arith.constant 0 : index
      %c0_34 = arith.constant 0 : index
      %39 = vector.load %arg8[%c0_33, %c0_34] : memref<4x32xf32, #tpu.memory_space<vmem>>, vector<2x32xf32>
      tpu.vector_store %arg8[%c0_33, %c0_34], %36 {strides = array<i32>} : memref<4x32xf32, #tpu.memory_space<vmem>>, vector<2x32xf32>,
      %c2 = arith.constant 2 : index
      %c0_35 = arith.constant 0 : index
      %40 = vector.load %arg8[%c2, %c0_35] : memref<4x32xf32, #tpu.memory_space<vmem>>, vector<2x32xf32>
      tpu.vector_store %arg8[%c2, %c0_35], %38 {strides = array<i32>} : memref<4x32xf32, #tpu.memory_space<vmem>>, vector<2x32xf32>,
      %c0_36 = arith.constant 0 : index
      %c0_37 = arith.constant 0 : index
      %41 = vector.load %arg8[%c0_36, %c0_37] : memref<4x32xf32, #tpu.memory_space<vmem>>, vector<4x32xf32>
      %c0_38 = arith.constant 0 : index
      %c0_39 = arith.constant 0 : index
      %42 = vector.load %arg3[%c0_38, %c0_39] : memref<32x2xf32, #tpu.memory_space<vmem>>, vector<32x2xf32>
      %cst_40 = arith.constant dense<0.000000e+00> : vector<4x2xf32>
      %43 = tpu.matmul %41, %42, %cst_40 {dimension_numbers = #tpu.dot_dimension_numbers<[1], [0], [0], [1], [0, 0, 1, 1], [], []>} : vector<4x32xf32>, vector<32x2xf32>, vector<4x2xf32> -> vector<4x2xf32>
      %cst_41 = arith.constant 0.000000e+00 : f32
      %44 = vector.broadcast %cst_41 : f32 to vector<4x2xf32>
      %45 = arith.maximumf %43, %44 : vector<4x2xf32>
      %c0_42 = arith.constant 0 : index
      %c0_43 = arith.constant 0 : index
      %46 = vector.load %arg4[%c0_42, %c0_43] : memref<2x32xf32, #tpu.memory_space<vmem>>, vector<2x32xf32>
      %cst_44 = arith.constant dense<0.000000e+00> : vector<4x32xf32>
      %47 = tpu.matmul %45, %46, %cst_44 {dimension_numbers = #tpu.dot_dimension_numbers<[1], [0], [0], [1], [0, 0, 1, 1], [], []>} : vector<4x2xf32>, vector<2x32xf32>, vector<4x32xf32> -> vector<4x32xf32>
      %48 = vector.extract_strided_slice %47 {offsets = [0, 0], sizes = [2, 32], strides = [1, 1]} : vector<4x32xf32> to vector<2x32xf32>
      %49 = vector.extract_strided_slice %47 {offsets = [2, 0], sizes = [2, 32], strides = [1, 1]} : vector<4x32xf32> to vector<2x32xf32>
      %50 = arith.addf %48, %49 : vector<2x32xf32>
      %51 = arith.negf %50 : vector<2x32xf32>
      %52 = math.exp %51 : vector<2x32xf32>
      %cst_45 = arith.constant 1.000000e+00 : f32
      %53 = vector.broadcast %cst_45 : f32 to vector<2x32xf32>
      %54 = arith.addf %53, %52 : vector<2x32xf32>
      %55 = arith.divf %53, %54 : vector<2x32xf32>
      %c0_46 = arith.constant 0 : index
      %c0_47 = arith.constant 0 : index
      %56 = vector.load %arg5[%c0_46, %c0_47] : memref<2x32xf32, #tpu.memory_space<vmem>>, vector<2x32xf32>
      tpu.vector_store %arg5[%c0_46, %c0_47], %55 {strides = array<i32>} : memref<2x32xf32, #tpu.memory_space<vmem>>, vector<2x32xf32>,
    } else {
    }
    return
  }
  func.func @transform_0(%arg0: i32, %arg1: i32) -> (i32, i32, i32) {
    %c0_i32 = arith.constant 0 : i32
    %c0_i32_0 = arith.constant 0 : i32
    return %arg0, %c0_i32, %arg1 : i32, i32, i32
  }
  func.func @transform_1(%arg0: i32, %arg1: i32) -> (i32, i32) {
    %c0_i32 = arith.constant 0 : i32
    %c0_i32_0 = arith.constant 0 : i32
    %c0_i32_1 = arith.constant 0 : i32
    return %c0_i32, %c0_i32_0 : i32, i32
  }
  func.func @transform_2(%arg0: i32, %arg1: i32) -> (i32, i32) {
    %c0_i32 = arith.constant 0 : i32
    %c0_i32_0 = arith.constant 0 : i32
    %c0_i32_1 = arith.constant 0 : i32
    return %c0_i32, %c0_i32_0 : i32, i32
  }
  func.func @transform_3(%arg0: i32, %arg1: i32) -> (i32, i32) {
    %c0_i32 = arith.constant 0 : i32
    %c0_i32_0 = arith.constant 0 : i32
    return %arg0, %c0_i32 : i32, i32
  }
}

</mosaic_0001>

<llo_original>
// kernel: tpu_custom_call.1
$region0: #{tpu_custom_call.1}
  #allocation0 [shape = 'u32[]', space=smem, size = 0x4, offset = 0x4, fixed_abs, tag = 'smem constant byte address 0x4 - core index']
  #allocation1 [shape = 'u32[72,128]{1,0:T(1,128)}', space=vmem, size = 0x9000, scoped, tag = 'internal scratch']
  #allocation2 [shape = 'f32[2,32,128]{2,1,0:T(8,128)}', space=vmem, size = 0x8000, scoped, tag = 'scratch operand']
  #allocation3 [shape = 'f32[2,32,128]{2,1,0:T(8,128)}', space=vmem, size = 0x8000, scoped, tag = 'scratch operand']
  #allocation4 [shape = 'f32[4,32]{1,0:T(4,128)}', space=vmem, size = 0x800, scoped, tag = 'scratch operand']
  %s0 = inlined_call_operand.hbm [shape: f32[2,32,256], index: 0, kind: input, shape index: {}]
  %s1 = inlined_call_operand.vmem [shape: f32[32,2], index: 1, kind: input, shape index: {}]
  %s2 = inlined_call_operand.vmem [shape: f32[2,32], index: 2, kind: input, shape index: {}]
  %s3 = inlined_call_operand.hbm [shape: f32[2,32], index: 3, kind: output, shape index: {}]
  %s4 = sld [smem:[#allocation0]]
  $region34: #{tpu_custom_call.1} parent=0
    _
  %s6 = ssub.s32 1, %s4
  %s7 = scalar_select 0, %s6, %s4
  $region1: #{tpu_custom_call.1} parent=0
    #allocation5 [shape = 'u8[65536]{0}', space=vmem, size = 0x10000, scoped, tag = 'input window, operand 0, single buffered']
    #allocation6 [shape = 's32[1]{0}', space=sflag, size = 0x4, scoped, tag = 'scoped memory for tpu_custom_call.1']
    #allocation7 [shape = 's32[1]{0}', space=sflag, size = 0x4, scoped, tag = 'scoped memory for tpu_custom_call.1']
    #allocation8 [shape = 'u8[1024]{0}', space=vmem, size = 0x400, scoped, tag = 'output window, operand 0, single buffered']
    %8 = vsyncpa [#allocation6], 0
    %9 = vsyncpa [#allocation7], 0
    // Predicated region
    $region2: #{tpu_custom_call.1} parent=1 // pred_check
      _
    $region3: #{tpu_custom_call.1} parent=1 // pred_check_branch
      %11 = sbr.rel (0) target = $region5
    $region4: #{tpu_custom_call.1} parent=1 // pred_region
      %13 = vsyncadd [#allocation6], 0
      %s14 = sshll.u32 %s0, 4
      %s15 = int_to_ptr.hbm [resolvable:$true] %s14
      %s16 = sshll.u32 [#allocation5], 4
      %s17 = int_to_ptr.vmem [resolvable:$true] %s16
      %22 = dma.hbm_to_vmem [thread:$0]  %s15, 2048, %s17, [#allocation6], 256, 256, 16
    $region5: #{tpu_custom_call.1} parent=1 // pred_fallthru
      _
    // Predicated region
    $region6: #{tpu_custom_call.1} parent=1 // pred_check
      _
    $region7: #{tpu_custom_call.1} parent=1 // pred_check_branch
      %24 = sbr.rel (0) target = $region9
    $region8: #{tpu_custom_call.1} parent=1 // pred_region
      _
    $region9: #{tpu_custom_call.1} parent=1 // pred_fallthru
      _
    // Predicated region
    $region10: #{tpu_custom_call.1} parent=1 // pred_check
      _
    $region11: #{tpu_custom_call.1} parent=1 // pred_check_branch
      %26 = sbr.rel (0) target = $region13
    $region12: #{tpu_custom_call.1} parent=1 // pred_region
      _
    $region13: #{tpu_custom_call.1} parent=1 // pred_fallthru
      _
    // Predicated region
    $region14: #{tpu_custom_call.1} parent=1 // pred_check
      _
    $region15: #{tpu_custom_call.1} parent=1 // pred_check_branch
      %28 = sbr.rel (0) target = $region17
    $region16: #{tpu_custom_call.1} parent=1 // pred_region
      %30 = dma.done [#allocation6], 2048
    $region17: #{tpu_custom_call.1} parent=1 // pred_fallthru
      _
    %p31 = scmp.eq.s32.totalorder 0, 0
    // Predicated region
    $region18: #{tpu_custom_call.1} parent=1 // pred_check
      %p32 = pneg %p31
    $region19: #{tpu_custom_call.1} parent=1 // pred_check_branch
      %34 = sbr.rel (%p32) target = $region21
    $region20: #{tpu_custom_call.1} parent=1 // pred_region
      %35 = vst [vmem:[#allocation2] sm:$0xff] 0.0
      %36 = vst [vmem:[#allocation2 + $0x8] sm:$0xff] 0.0
      %37 = vst [vmem:[#allocation2 + $0x10] sm:$0xff] 0.0
      %38 = vst [vmem:[#allocation2 + $0x18] sm:$0xff] 0.0
      %39 = vst [vmem:[#allocation2 + $0x20] sm:$0xff] 0.0
      %40 = vst [vmem:[#allocation2 + $0x28] sm:$0xff] 0.0
      %41 = vst [vmem:[#allocation2 + $0x30] sm:$0xff] 0.0
      %42 = vst [vmem:[#allocation2 + $0x38] sm:$0xff] 0.0
      %43 = vst [vmem:[#allocation3] sm:$0xff] -inf
      %44 = vst [vmem:[#allocation3 + $0x8] sm:$0xff] -inf
      %45 = vst [vmem:[#allocation3 + $0x10] sm:$0xff] -inf
      %46 = vst [vmem:[#allocation3 + $0x18] sm:$0xff] -inf
      %47 = vst [vmem:[#allocation3 + $0x20] sm:$0xff] -inf
      %48 = vst [vmem:[#allocation3 + $0x28] sm:$0xff] -inf
      %49 = vst [vmem:[#allocation3 + $0x30] sm:$0xff] -inf
      %50 = vst [vmem:[#allocation3 + $0x38] sm:$0xff] -inf
    $region21: #{tpu_custom_call.1} parent=1 // pred_fallthru
      _
    %s51 = smul.u32 0, 256
    %s52 = ssub.s32 256, %s51
    %v53 = vlaneseq
    %v54 = vand.u32 %v53, 127
    %v55 = vld [vmem:[#allocation2] sm:$0xff]
    %v56 = vld [vmem:[#allocation2 + $0x8] sm:$0xff]
    %v57 = vld [vmem:[#allocation2 + $0x10] sm:$0xff]
    %v58 = vld [vmem:[#allocation2 + $0x18] sm:$0xff]
    %v59 = vld [vmem:[#allocation2 + $0x20] sm:$0xff]
    %v60 = vld [vmem:[#allocation2 + $0x28] sm:$0xff]
    %v61 = vld [vmem:[#allocation2 + $0x30] sm:$0xff]
    %v62 = vld [vmem:[#allocation2 + $0x38] sm:$0xff]
    %v63 = vld [vmem:[#allocation3] sm:$0xff]
    %v64 = vld [vmem:[#allocation3 + $0x8] sm:$0xff]
    %v65 = vld [vmem:[#allocation3 + $0x10] sm:$0xff]
    %v66 = vld [vmem:[#allocation3 + $0x18] sm:$0xff]
    %v67 = vld [vmem:[#allocation3 + $0x20] sm:$0xff]
    %v68 = vld [vmem:[#allocation3 + $0x28] sm:$0xff]
    %v69 = vld [vmem:[#allocation3 + $0x30] sm:$0xff]
    %v70 = vld [vmem:[#allocation3 + $0x38] sm:$0xff]
    %v71 = vld [vmem:[#allocation5] sm:$0xff]
    %v72 = vld [vmem:[#allocation5 + $0x10] sm:$0xff]
    %v73 = vld [vmem:[#allocation5 + $0x20] sm:$0xff]
    %v74 = vld [vmem:[#allocation5 + $0x30] sm:$0xff]
    %v75 = vld [vmem:[#allocation5 + $0x40] sm:$0xff]
    %v76 = vld [vmem:[#allocation5 + $0x50] sm:$0xff]
    %v77 = vld [vmem:[#allocation5 + $0x60] sm:$0xff]
    %v78 = vld [vmem:[#allocation5 + $0x70] sm:$0xff]
    %v79 = vstv %s52
    %vm80 = vcmp.lt.s32.totalorder %v54, %v79
    %v81 = vsel %vm80, %v71, 0.0
    %v82 = vsel %vm80, %v72, 0.0
    %v83 = vsel %vm80, %v73, 0.0
    %v84 = vsel %vm80, %v74, 0.0
    %v85 = vsel %vm80, %v75, 0.0
    %v86 = vsel %vm80, %v76, 0.0
    %v87 = vsel %vm80, %v77, 0.0
    %v88 = vsel %vm80, %v78, 0.0
    %v89 = vadd.f32 %v55, %v81
    %v90 = vadd.f32 %v56, %v82
    %v91 = vadd.f32 %v57, %v83
    %v92 = vadd.f32 %v58, %v84
    %v93 = vadd.f32 %v59, %v85
    %v94 = vadd.f32 %v60, %v86
    %v95 = vadd.f32 %v61, %v87
    %v96 = vadd.f32 %v62, %v88
    %v97 = vsel %vm80, %v71, -inf
    %v98 = vsel %vm80, %v72, -inf
    %v99 = vsel %vm80, %v73, -inf
    %v100 = vsel %vm80, %v74, -inf
    %v101 = vsel %vm80, %v75, -inf
    %v102 = vsel %vm80, %v76, -inf
    %v103 = vsel %vm80, %v77, -inf
    %v104 = vsel %vm80, %v78, -inf
    %v105 = vmax.f32 %v63, %v97
    %v106 = vmax.f32 %v64, %v98
    %v107 = vmax.f32 %v65, %v99
    %v108 = vmax.f32 %v66, %v100
    %v109 = vmax.f32 %v67, %v101
    %v110 = vmax.f32 %v68, %v102
    %v111 = vmax.f32 %v69, %v103
    %v112 = vmax.f32 %v70, %v104
    %v113 = vld [vmem:[#allocation5 + $0x8] sm:$0xff]
    %v114 = vld [vmem:[#allocation5 + $0x18] sm:$0xff]
    %v115 = vld [vmem:[#allocation5 + $0x28] sm:$0xff]
    %v116 = vld [vmem:[#allocation5 + $0x38] sm:$0xff]
    %v117 = vld [vmem:[#allocation5 + $0x48] sm:$0xff]
    %v118 = vld [vmem:[#allocation5 + $0x58] sm:$0xff]
    %v119 = vld [vmem:[#allocation5 + $0x68] sm:$0xff]
    %v120 = vld [vmem:[#allocation5 + $0x78] sm:$0xff]
    %s121 = ssub.s32 128, %s51
    %v122 = vstv %s121
    %vm123 = vcmp.lt.s32.totalorder %v54, %v122
    %v124 = vsel %vm123, %v113, 0.0
    %v125 = vsel %vm123, %v114, 0.0
    %v126 = vsel %vm123, %v115, 0.0
    %v127 = vsel %vm123, %v116, 0.0
    %v128 = vsel %vm123, %v117, 0.0
    %v129 = vsel %vm123, %v118, 0.0
    %v130 = vsel %vm123, %v119, 0.0
    %v131 = vsel %vm123, %v120, 0.0
    %v132 = vadd.f32 %v89, %v124
    %v133 = vadd.f32 %v90, %v125
    %v134 = vadd.f32 %v91, %v126
    %v135 = vadd.f32 %v92, %v127
    %v136 = vadd.f32 %v93, %v128
    %v137 = vadd.f32 %v94, %v129
    %v138 = vadd.f32 %v95, %v130
    %v139 = vadd.f32 %v96, %v131
    %v140 = vsel %vm123, %v113, -inf
    %v141 = vsel %vm123, %v114, -inf
    %v142 = vsel %vm123, %v115, -inf
    %v143 = vsel %vm123, %v116, -inf
    %v144 = vsel %vm123, %v117, -inf
    %v145 = vsel %vm123, %v118, -inf
    %v146 = vsel %vm123, %v119, -inf
    %v147 = vsel %vm123, %v120, -inf
    %v148 = vmax.f32 %v105, %v140
    %v149 = vmax.f32 %v106, %v141
    %v150 = vmax.f32 %v107, %v142
    %v151 = vmax.f32 %v108, %v143
    %v152 = vmax.f32 %v109, %v144
    %v153 = vmax.f32 %v110, %v145
    %v154 = vmax.f32 %v111, %v146
    %v155 = vmax.f32 %v112, %v147
    %156 = vst [vmem:[#allocation2] sm:$0xff] %v132
    %157 = vst [vmem:[#allocation2 + $0x8] sm:$0xff] %v133
    %158 = vst [vmem:[#allocation2 + $0x10] sm:$0xff] %v134
    %159 = vst [vmem:[#allocation2 + $0x18] sm:$0xff] %v135
    %160 = vst [vmem:[#allocation2 + $0x20] sm:$0xff] %v136
    %161 = vst [vmem:[#allocation2 + $0x28] sm:$0xff] %v137
    %162 = vst [vmem:[#allocation2 + $0x30] sm:$0xff] %v138
    %163 = vst [vmem:[#allocation2 + $0x38] sm:$0xff] %v139
    %164 = vst [vmem:[#allocation3] sm:$0xff] %v148
    %165 = vst [vmem:[#allocation3 + $0x8] sm:$0xff] %v149
    %166 = vst [vmem:[#allocation3 + $0x10] sm:$0xff] %v150
    %167 = vst [vmem:[#allocation3 + $0x18] sm:$0xff] %v151
    %168 = vst [vmem:[#allocation3 + $0x20] sm:$0xff] %v152
    %169 = vst [vmem:[#allocation3 + $0x28] sm:$0xff] %v153
    %170 = vst [vmem:[#allocation3 + $0x30] sm:$0xff] %v154
    %171 = vst [vmem:[#allocation3 + $0x38] sm:$0xff] %v155
    // Predicated region
    $region22: #{tpu_custom_call.1} parent=1 // pred_check
      %p172 = pneg %p31
    $region23: #{tpu_custom_call.1} parent=1 // pred_check_branch
      %174 = sbr.rel (%p172) target = $region25
    $region24: #{tpu_custom_call.1} parent=1 // pred_region
      %v175 = vld [vmem:[#allocation2] sm:$0xff]
      %v176 = vld [vmem:[#allocation2 + $0x8] sm:$0xff]
      %v177 = vld [vmem:[#allocation2 + $0x10] sm:$0xff]
      %v178 = vld [vmem:[#allocation2 + $0x18] sm:$0xff]
      %v179 = vld [vmem:[#allocation2 + $0x20] sm:$0xff]
      %v180 = vld [vmem:[#allocation2 + $0x28] sm:$0xff]
      %v181 = vld [vmem:[#allocation2 + $0x30] sm:$0xff]
      %v182 = vld [vmem:[#allocation2 + $0x38] sm:$0xff]
      %183 = vadd.xlane.f32.xlu0 %v175
      %v184 = vpop.xlane.xlu0 %183
      %185 = vadd.xlane.f32.xlu0 %v176
      %v186 = vpop.xlane.xlu0 %185
      %187 = vadd.xlane.f32.xlu0 %v177
      %v188 = vpop.xlane.xlu0 %187
      %189 = vadd.xlane.f32.xlu0 %v178
      %v190 = vpop.xlane.xlu0 %189
      %191 = vadd.xlane.f32.xlu0 %v179
      %v192 = vpop.xlane.xlu0 %191
      %193 = vadd.xlane.f32.xlu0 %v180
      %v194 = vpop.xlane.xlu0 %193
      %195 = vadd.xlane.f32.xlu0 %v181
      %v196 = vpop.xlane.xlu0 %195
      %197 = vadd.xlane.f32.xlu0 %v182
      %v198 = vpop.xlane.xlu0 %197
      %v199 = vmul.f32 %v184, 0.00390625
      %v200 = vmul.f32 %v186, 0.00390625
      %v201 = vmul.f32 %v188, 0.00390625
      %v202 = vmul.f32 %v190, 0.00390625
      %v203 = vmul.f32 %v192, 0.00390625
      %v204 = vmul.f32 %v194, 0.00390625
      %v205 = vmul.f32 %v196, 0.00390625
      %v206 = vmul.f32 %v198, 0.00390625
      %v207 = vld [vmem:[#allocation3] sm:$0xff]
      %v208 = vld [vmem:[#allocation3 + $0x8] sm:$0xff]
      %v209 = vld [vmem:[#allocation3 + $0x10] sm:$0xff]
      %v210 = vld [vmem:[#allocation3 + $0x18] sm:$0xff]
      %v211 = vld [vmem:[#allocation3 + $0x20] sm:$0xff]
      %v212 = vld [vmem:[#allocation3 + $0x28] sm:$0xff]
      %v213 = vld [vmem:[#allocation3 + $0x30] sm:$0xff]
      %v214 = vld [vmem:[#allocation3 + $0x38] sm:$0xff]
      %215 = vmax.xlane.f32.xlu0 %v207
      %v216 = vpop.xlane.xlu0 %215
      %217 = vmax.xlane.f32.xlu0 %v208
      %v218 = vpop.xlane.xlu0 %217
      %219 = vmax.xlane.f32.xlu0 %v209
      %v220 = vpop.xlane.xlu0 %219
      %221 = vmax.xlane.f32.xlu0 %v210
      %v222 = vpop.xlane.xlu0 %221
      %223 = vmax.xlane.f32.xlu0 %v211
      %v224 = vpop.xlane.xlu0 %223
      %225 = vmax.xlane.f32.xlu0 %v212
      %v226 = vpop.xlane.xlu0 %225
      %227 = vmax.xlane.f32.xlu0 %v213
      %v228 = vpop.xlane.xlu0 %227
      %229 = vmax.xlane.f32.xlu0 %v214
      %v230 = vpop.xlane.xlu0 %229
      %v239 = vperm.slane %v199, %v54
      %v240 = vadd.s32 %v54, 4294967288
      %v241 = vperm.slane %v200, %v240
      %vm242 = vcmask 130112
      %v243 = vsel %vm242, %v241, %v239
      %v244 = vadd.s32 %v54, 4294967280
      %v245 = vperm.slane %v201, %v244
      %vm246 = vcmask 195712
      %v247 = vsel %vm246, %v245, %v243
      %v248 = vadd.s32 %v54, 4294967272
      %v249 = vperm.slane %v202, %v248
      %vm250 = vcmask 261312
      %v251 = vsel %vm250, %v249, %v247
      %v252 = vperm.slane %v203, %v54
      %v253 = vperm.slane %v204, %v240
      %v254 = vsel %vm242, %v253, %v252
      %v255 = vperm.slane %v205, %v244
      %v256 = vsel %vm246, %v255, %v254
      %v257 = vperm.slane %v206, %v248
      %v258 = vsel %vm250, %v257, %v256
      %vm259 = vcmask 1041409
      %v260 = vsel %vm259, %v258, %v251
      %vm262 = vcmask 254976
      %263 = vst.msk [vmem:[#allocation4] sm:$0x3] %vm262, %v260
      %v272 = vperm.slane %v216, %v54
      %v273 = vperm.slane %v218, %v240
      %v274 = vsel %vm242, %v273, %v272
      %v275 = vperm.slane %v220, %v244
      %v276 = vsel %vm246, %v275, %v274
      %v277 = vperm.slane %v222, %v248
      %v278 = vsel %vm250, %v277, %v276
      %v279 = vperm.slane %v224, %v54
      %v280 = vperm.slane %v226, %v240
      %v281 = vsel %vm242, %v280, %v279
      %v282 = vperm.slane %v228, %v244
      %v283 = vsel %vm246, %v282, %v281
      %v284 = vperm.slane %v230, %v248
      %v285 = vsel %vm250, %v284, %v283
      %v286 = vsel %vm259, %v285, %v278
      %288 = vst.msk [vmem:[#allocation4 + $0x2] sm:$0x3] %vm262, %v286
      %v289 = vld [vmem:[#allocation4] sm:$0xf]
      %v290 = vld [vmem:[%s1] sm:$0xff]
      %v291 = vld [vmem:[%s1 + $0x8] sm:$0xff]
      %v292 = vld [vmem:[%s1 + $0x10] sm:$0xff]
      %v293 = vld [vmem:[%s1 + $0x18] sm:$0xff]
      %vm294 = vcmask 261120
      %v296 = vsel %vm294, %v289, 0
      %298 = vmatpush.msra.mxu0 0.0
      %299 = vmatpush.msra.mxu0 0.0
      %300 = vmatpush.msra.mxu0 0.0
      %301 = vmatpush.msra.mxu0 0.0
      %302 = vmatpush.msra.mxu0 0.0
      %303 = vmatpush.msra.mxu0 0.0
      %304 = vmatpush.msra.mxu0 0.0
      %305 = vmatpush.msra.mxu0 0.0
      %306 = vmatpush.msra.mxu0 0.0
      %307 = vmatpush.msra.mxu0 0.0
      %308 = vmatpush.msra.mxu0 0.0
      %309 = vmatpush.msra.mxu0 0.0
      %310 = vmatpush.msra.mxu0 %v293
      %311 = vmatpush.msra.mxu0 %v292
      %312 = vmatpush.msra.mxu0 %v291
      %313 = vmatpush.msra.mxu0 %v290
      %314 = vmatmul.f32.gmra.mxu0 %v296
      %v315 = vpop.f32.mrf.mxu0
      %v316 = vadd.f32 0.0, %v315
      %317 = vdwg.mxu0
      %v318 = vmax.f32 %v316, 0.0
      %v319 = vld [vmem:[%s2] sm:$0x3]
      %vm320 = vcmask 15360
      %v322 = vsel %vm320, %v318, 0
      %vm324 = vcmask 1041408
      %v326 = vsel %vm324, %v319, 0
      %328 = vmatpush.msra.mxu0 0.0
      %329 = vmatpush.msra.mxu0 0.0
      %330 = vmatpush.msra.mxu0 0.0
      %331 = vmatpush.msra.mxu0 0.0
      %332 = vmatpush.msra.mxu0 0.0
      %333 = vmatpush.msra.mxu0 0.0
      %334 = vmatpush.msra.mxu0 0.0
      %335 = vmatpush.msra.mxu0 0.0
      %336 = vmatpush.msra.mxu0 0.0
      %337 = vmatpush.msra.mxu0 0.0
      %338 = vmatpush.msra.mxu0 0.0
      %339 = vmatpush.msra.mxu0 0.0
      %340 = vmatpush.msra.mxu0 0.0
      %341 = vmatpush.msra.mxu0 0.0
      %342 = vmatpush.msra.mxu0 0.0
      %343 = vmatpush.msra.mxu0 %v326
      %344 = vmatmul.f32.gmra.mxu0 %v322
      %v345 = vpop.f32.mrf.mxu0
      %v346 = vadd.f32 0.0, %v345
      %347 = vdwg.mxu0
      %v349 = vrot.slane %v346, 2
      %v351 = vadd.f32 %v346, %v349
      %v352 = vxor.u32 %v351, 2147483648
      %v353 = vmul.f32 %v352, 1.442695
      %v354 = vpow.pop %v353
      %v355 = vadd.f32 %v354, 1.0
      %v356 = vrcp.pop %v355
      %v357 = vmul.f32 %v355, %v356
      %v358 = vsub.f32 1.0, %v357
      %v359 = vmul.f32 %v356, %v358
      %v360 = vadd.f32 %v356, %v359
      %vm361 = vweird.f32 %v355
      %vm362 = vweird.f32 %v356
      %vm363 = vmor %vm361, %vm362
      %v364 = vsel %vm363, %v356, %v360
      %v365 = vand.u32 2147483647, %v355
      %vm366 = vcmp.eq.f32.partialorder %v365, 8.507059e+37
      %v367 = vand.u32 %v355, 2147483648
      %v368 = vor.u32 1.1754944e-38, %v367
      %v369 = vsel %vm366, %v368, %v364
      %v370 = vmul.f32 1.0, %v369
      %371 = vst.msk [vmem:[#allocation8] sm:$0x3] %vm262, %v370
    $region25: #{tpu_custom_call.1} parent=1 // pred_fallthru
      _
    // Predicated region
    $region26: #{tpu_custom_call.1} parent=1 // pred_check
      _
    $region27: #{tpu_custom_call.1} parent=1 // pred_check_branch
      %373 = sbr.rel (0) target = $region29
    $region28: #{tpu_custom_call.1} parent=1 // pred_region
      %375 = vsyncadd [#allocation7], 0
      %s377 = sshll.u32 [#allocation8], 4
      %s378 = int_to_ptr.vmem [resolvable:$true] %s377
      %s379 = sshll.u32 %s3, 4
      %s380 = int_to_ptr.hbm [resolvable:$true] %s379
      %382 = dma.vmem_to_hbm [thread:$0]  %s378, 32, %s380, [#allocation7]
    $region29: #{tpu_custom_call.1} parent=1 // pred_fallthru
      _
    // Predicated region
    $region30: #{tpu_custom_call.1} parent=1 // pred_check
      _
    $region31: #{tpu_custom_call.1} parent=1 // pred_check_branch
      %384 = sbr.rel (0) target = $region33
    $region32: #{tpu_custom_call.1} parent=1 // pred_region
      %386 = dma.done [#allocation7], 32
    $region33: #{tpu_custom_call.1} parent=1 // pred_fallthru
      _
    %387 = vsyncpa [#allocation6], 1
    %388 = vsyncpa [#allocation7], 1

</llo_original>
